<compile_context>
chip_gen: v5e
topology: v5e:2x2
jax: 0.10.0
libtpu: 0.0.40
codegen_flags: <defaults>
</compile_context>

<pallas_src>
import functools

import numpy as np
import jax
import jax.numpy as jnp
from jax import lax
from jax.experimental import pallas as pl
from jax.experimental.pallas import tpu as pltpu


def _round_up(a, b):
    return -(-a // b) * b


# -----------------------------------------------------------------------------
# Deterministic parameter construction (mirrors HiPPO_LegT.__init__):
#   A, B = transition('lmu', N); bilinear (Tustin) discretization with step dt.
# scipy-free reimplementation of transition(...) + cont2discrete(method='bilinear').
# -----------------------------------------------------------------------------
def make_hippo_legt_params(N, dt):
    Q = np.arange(N, dtype=np.float64)
    R = (2.0 * Q + 1.0)[:, None]
    j, i = np.meshgrid(Q, Q)
    A = np.where(i < j, -1.0, (-1.0) ** (i - j + 1.0)) * R          # (N, N)
    B = ((-1.0) ** Q)[:, None] * R                                   # (N, 1)
    I = np.eye(N)
    ima = I - (dt / 2.0) * A
    Ad = np.linalg.solve(ima, I + (dt / 2.0) * A)
    Bd = np.linalg.solve(ima, dt * B).squeeze(-1)                    # (N,)
    # TODO(synk): eval_matrix (scipy.special.eval_legendre) only feeds reconstruct(),
    # not forward(); omitted.
    return Ad.astype(np.float32), Bd.astype(np.float32)


# -----------------------------------------------------------------------------
# Fused K-step block-recurrence operator (exact algebraic unrolling, f64 precompute):
#   C_s = A^s C_0 + sum_{j=1..s} A^{s-j} B f_j^T ,  s = 1..K
#   PW = [P | W]  of shape (K*N, N+K) with
#        P block row s-1 = A^s,   W[(s-1)N:sN, j-1] = A^{s-j} B  (j <= s, else 0)
# so that  [C_1; ...; C_K] = PW @ [C_0 ; F]   with F = (K, MT) chunk inputs.
# -----------------------------------------------------------------------------
def make_block_operator(Ad, Bd, K):
    N = Ad.shape[0]
    A64 = np.asarray(Ad, np.float64)
    B64 = np.asarray(Bd, np.float64).reshape(N, 1)
    pows = [np.eye(N)]
    for _ in range(K):
        pows.append(A64 @ pows[-1])                  # pows[s] = A^s
    P = np.concatenate(pows[1:K + 1], axis=0)        # (K*N, N)
    W = np.zeros((K * N, K), dtype=np.float64)
    for s in range(1, K + 1):
        for jj in range(1, s + 1):
            W[(s - 1) * N: s * N, jj - 1] = (pows[s - jj] @ B64)[:, 0]
    return np.concatenate([P, W], axis=1).astype(np.float32)   # (K*N, N+K)


# -----------------------------------------------------------------------------
# Pallas kernel: one (M tile, time chunk) grid step.
#   x_ref   : (K, MT)         chunk inputs, time on sublanes, batch on lanes
#   pw_ref  : (K*N, N+K)      fused operator [P | W] (resident; constant index_map)
#   out_ref : (K*N, MT)       stacked transposed states C_1..C_K for this chunk
#   z_ref   : (N+K, MT) VMEM  scratch [C ; F]: rows [0,N) = carried state, rows [N,N+K) = F
# -----------------------------------------------------------------------------
def _hippo_legt_kernel(x_ref, pw_ref, out_ref, z_ref, *, N, K, KN, out_is_f32):
    @pl.when(pl.program_id(1) == 0)
    def _init():
        z_ref[...] = jnp.zeros_like(z_ref)

    # Stage this chunk's inputs below the carried state (sublane-aligned copy).
    z_ref[N:N + K, :] = x_ref[...]

    # Single fused MXU matmul: all K states of the chunk at once.
    s = jnp.dot(pw_ref[...], z_ref[...], preferred_element_type=jnp.float32)
    out_ref[...] = s.astype(out_ref.dtype)

    # Carry the last state C_K into the next time chunk.  In the f32 path read it back
    # from the output block in VMEM (cheap) instead of slicing the live matmul value,
    # which would extend its live range and block the MXU-result drain.
    if out_is_f32:
        z_ref[0:N, :] = out_ref[KN - N:KN, :]
    else:
        z_ref[0:N, :] = s[KN - N:KN, :]        # keep the recurrent carry exact in f32


def hippo_legt_forward(x, Ad, Bd, *, k_steps=None, m_tile=None, out_dtype=jnp.float32):
    """x: (d0, d1, L) float32  ->  (L, d0, d1, N) `out_dtype` (matches PyTorch forward)."""
    d0, d1, L = x.shape
    N = Ad.shape[0]
    M = d0 * d1

    # K time steps per chunk: aim for K*N ~ 512 rows (large fused output block, MXU-friendly),
    # multiple of 8 so the x time-block stays sublane-aligned, and not far past L.
    # (K can be raised to 32 (KN=1024) for even larger blocks; re-validate numerics first.)
    if k_steps is None:
        K = max(1, 512 // N)
        K = max(8, _round_up(K, 8))
        K = min(K, max(8, _round_up(L, 8)))
    else:
        K = k_steps
    KN = K * N

    # Lane-dense batch tile (multiple of 128).  Large (up to 2048 lanes -> 2-4 MiB output
    # blocks at K*N=512) to amortize per-grid-step overhead, but capped so that there are
    # at least 2 M-tiles whenever possible: the M axis is the only 'parallel' dimension and
    # must split across both TensorCores on v7x.
    M_pad128 = _round_up(M, 128)
    if m_tile is None:
        MT = min(2048, M_pad128)
        n128 = M_pad128 // 128
        if n128 >= 2:
            MT = min(MT, (n128 // 2) * 128)
        MT = max(MT, 128)
    else:
        MT = m_tile

    L_pad = _round_up(L, K)
    M_pad = _round_up(M, MT)
    n_chunks = L_pad // K
    n_mtiles = M_pad // MT

    # Input layout plumbing (small: N-times less data than the output): time-major,
    # batch on lanes, zero-padded.
    x_tm = jnp.transpose(x, (2, 0, 1)).reshape(L, M).astype(jnp.float32)
    x_tm = jnp.pad(x_tm, ((0, L_pad - L), (0, M_pad - M)))

    PW = jnp.asarray(make_block_operator(Ad, Bd, K))          # (K*N, N+K), resident

    kernel = functools.partial(_hippo_legt_kernel, N=N, K=K, KN=KN,
                               out_is_f32=(out_dtype == jnp.float32))

    out = pl.pallas_call(
        kernel,
        out_shape=jax.ShapeDtypeStruct((n_chunks * KN, M_pad), out_dtype),
        grid_spec=pltpu.PrefetchScalarGridSpec(
            num_scalar_prefetch=0,
            grid=(n_mtiles, n_chunks),            # M tiles (parallel), time (arbitrary, innermost)
            in_specs=[
                pl.BlockSpec((K, MT), lambda m, t: (t, m)),          # x chunk
                pl.BlockSpec((KN, N + K), lambda m, t: (0, 0)),      # fused PW (resident)
            ],
            out_specs=pl.BlockSpec((KN, MT), lambda m, t: (t, m)),
            scratch_shapes=[pltpu.VMEM((N + K, MT), jnp.float32)],   # [C ; F] scratch
        ),
        compiler_params=pltpu.CompilerParams(
            dimension_semantics=("parallel", "arbitrary"),
            vmem_limit_bytes=32 * 1024 * 1024,
        ),
    )(x_tm, PW)

    # Output layout plumbing: (n_chunks*K*N, M_pad) -> (L, d0, d1, N).
    # Padding columns are sliced off BEFORE the transpose to avoid relaying out dead data.
    # TODO(synk): this transpose re-reads/re-writes the whole output in HBM; in a real model
    # fuse it with the downstream consumer or consume the kernel-native (L, N, M) layout.
    out = out.reshape(n_chunks, K, N, M_pad)[:, :, :, :M]
    out = jnp.transpose(out, (0, 1, 3, 2)).reshape(L_pad, M, N)[:L]
    return out.reshape(L, d0, d1, N)


# -----------------------------------------------------------------------------
# Pure-JAX reference (mirrors the PyTorch loop) for a correctness check.
# -----------------------------------------------------------------------------
def hippo_legt_reference(x, Ad, Bd):
    d0, d1, L = x.shape
    xT = jnp.transpose(x, (2, 0, 1))                  # (L, d0, d1)
    c0 = jnp.zeros((d0, d1, Ad.shape[0]), jnp.float32)

    def step(c, f):
        new = f[..., None] * Bd[None, None, :]
        c = c @ Ad.T + new
        return c, c

    _, cs = lax.scan(step, c0, xT)
    return cs                                         # (L, d0, d1, N)


if __name__ == "__main__":
    d0, d1, L, N = 2, 4, 16, 32
    dt = 1.0 / L
    Ad, Bd = make_hippo_legt_params(N, dt)

    key = jax.random.PRNGKey(0)
    x = jax.random.normal(key, (d0, d1, L), dtype=jnp.float32)

    out = hippo_legt_forward(x, Ad, Bd)
    out = jax.block_until_ready(out)

    ref = jax.block_until_ready(hippo_legt_reference(x, jnp.asarray(Ad), jnp.asarray(Bd)))

    assert out.shape == (L, d0, d1, N), out.shape
    np.testing.assert_allclose(np.asarray(out), np.asarray(ref), rtol=2e-2, atol=2e-2)
    print("KERNEL_OK")
</pallas_src>

<mosaic_0001>
module attributes {stable_mosaic.version = 11 : i64} {
  func.func @_hippo_legt_kernel(%arg0: i32, %arg1: i32, %arg2: memref<16x128xf32, #tpu.memory_space<vmem>>, %arg3: memref<512x48xf32, #tpu.memory_space<vmem>>, %arg4: memref<512x128xf32, #tpu.memory_space<vmem>>, %arg5: memref<48x128xf32, #tpu.memory_space<vmem>>) attributes {dimension_semantics = [#tpu.dimension_semantics<parallel>, #tpu.dimension_semantics<arbitrary>], iteration_bounds = array<i64: 1, 1>, scalar_prefetch = 0 : i64, scratch_operands = 1 : i64, tpu.core_type = #tpu.core_type<tc>, window_params = [{transform_indices = @transform_0, window_bounds = array<i64: 16, 128>}, {pipeline_mode = #tpu.pipeline_mode<synchronous>, transform_indices = @transform_1, window_bounds = array<i64: 512, 48>}, {transform_indices = @transform_2, window_bounds = array<i64: 512, 128>}]} {
    %c0_i32 = arith.constant 0 : i32
    %0 = arith.cmpi eq, %arg1, %c0_i32 : i32
    %1 = arith.extui %0 : i1 to i32
    %c0_i32_0 = arith.constant 0 : i32
    %2 = arith.cmpi ne, %1, %c0_i32_0 : i32
    scf.if %2 {
      %cst_12 = arith.constant 0.000000e+00 : f32
      %11 = vector.broadcast %cst_12 : f32 to vector<48x128xf32>
      %c0_13 = arith.constant 0 : index
      %c0_14 = arith.constant 0 : index
      %12 = vector.load %arg5[%c0_13, %c0_14] : memref<48x128xf32, #tpu.memory_space<vmem>>, vector<48x128xf32>
      tpu.vector_store %arg5[%c0_13, %c0_14], %11 {strides = array<i32>} : memref<48x128xf32, #tpu.memory_space<vmem>>, vector<48x128xf32>,
    } else {
    }
    %c0 = arith.constant 0 : index
    %c0_1 = arith.constant 0 : index
    %3 = vector.load %arg2[%c0, %c0_1] : memref<16x128xf32, #tpu.memory_space<vmem>>, vector<16x128xf32>
    %c32 = arith.constant 32 : index
    %c0_2 = arith.constant 0 : index
    %4 = vector.load %arg5[%c32, %c0_2] : memref<48x128xf32, #tpu.memory_space<vmem>>, vector<16x128xf32>
    tpu.vector_store %arg5[%c32, %c0_2], %3 {strides = array<i32>} : memref<48x128xf32, #tpu.memory_space<vmem>>, vector<16x128xf32>,
    %c0_3 = arith.constant 0 : index
    %c0_4 = arith.constant 0 : index
    %5 = vector.load %arg3[%c0_3, %c0_4] : memref<512x48xf32, #tpu.memory_space<vmem>>, vector<512x48xf32>
    %c0_5 = arith.constant 0 : index
    %c0_6 = arith.constant 0 : index
    %6 = vector.load %arg5[%c0_5, %c0_6] : memref<48x128xf32, #tpu.memory_space<vmem>>, vector<48x128xf32>
    %cst = arith.constant dense<0.000000e+00> : vector<512x128xf32>
    %7 = tpu.matmul %5, %6, %cst {dimension_numbers = #tpu.dot_dimension_numbers<[1], [0], [0], [1], [0, 0, 1, 1], [], []>} : vector<512x48xf32>, vector<48x128xf32>, vector<512x128xf32> -> vector<512x128xf32>
    %c0_7 = arith.constant 0 : index
    %c0_8 = arith.constant 0 : index
    %8 = vector.load %arg4[%c0_7, %c0_8] : memref<512x128xf32, #tpu.memory_space<vmem>>, vector<512x128xf32>
    tpu.vector_store %arg4[%c0_7, %c0_8], %7 {strides = array<i32>} : memref<512x128xf32, #tpu.memory_space<vmem>>, vector<512x128xf32>,
    %c480 = arith.constant 480 : index
    %c0_9 = arith.constant 0 : index
    %9 = vector.load %arg4[%c480, %c0_9] : memref<512x128xf32, #tpu.memory_space<vmem>>, vector<32x128xf32>
    %c0_10 = arith.constant 0 : index
    %c0_11 = arith.constant 0 : index
    %10 = vector.load %arg5[%c0_10, %c0_11] : memref<48x128xf32, #tpu.memory_space<vmem>>, vector<32x128xf32>
    tpu.vector_store %arg5[%c0_10, %c0_11], %9 {strides = array<i32>} : memref<48x128xf32, #tpu.memory_space<vmem>>, vector<32x128xf32>,
    return
  }
  func.func @transform_0(%arg0: i32, %arg1: i32) -> (i32, i32) {
    %c0_i32 = arith.constant 0 : i32
    return %arg1, %arg0 : i32, i32
  }
  func.func @transform_1(%arg0: i32, %arg1: i32) -> (i32, i32) {
    %c0_i32 = arith.constant 0 : i32
    %c0_i32_0 = arith.constant 0 : i32
    %c0_i32_1 = arith.constant 0 : i32
    return %c0_i32, %c0_i32_0 : i32, i32
  }
  func.func @transform_2(%arg0: i32, %arg1: i32) -> (i32, i32) {
    %c0_i32 = arith.constant 0 : i32
    return %arg1, %arg0 : i32, i32
  }
}

</mosaic_0001>

<llo_original>
// kernel: tpu_custom_call.1
$region0: #{tpu_custom_call.1}
  #allocation0 [shape = 'u32[]', space=smem, size = 0x4, offset = 0x4, fixed_abs, tag = 'smem constant byte address 0x4 - core index']
  #allocation1 [shape = 'u32[72,128]{1,0:T(1,128)}', space=vmem, size = 0x9000, scoped, tag = 'internal scratch']
  #allocation2 [shape = 'f32[48,128]{1,0:T(8,128)}', space=vmem, size = 0x6000, scoped, tag = 'scratch operand']
  %s0 = inlined_call_operand.vmem [shape: f32[16,128], index: 0, kind: input, shape index: {}]
  %s1 = inlined_call_operand.vmem [shape: f32[512,48], index: 1, kind: input, shape index: {}]
  %s2 = inlined_call_operand.hbm [shape: f32[512,128], index: 2, kind: output, shape index: {}]
  %s3 = sld [smem:[#allocation0]]
  $region22: #{tpu_custom_call.1} parent=0
    _
  %s5 = ssub.s32 1, %s3
  %s6 = scalar_select 0, %s5, %s3
  $region1: #{tpu_custom_call.1} parent=0
    #allocation3 [shape = 'u8[262144]{0}', space=vmem, size = 0x40000, scoped, tag = 'output window, operand 0, single buffered']
    #allocation4 [shape = 's32[1]{0}', space=sflag, size = 0x4, scoped, tag = 'scoped memory for tpu_custom_call.1']
    %7 = vsyncpa [#allocation4], 0
    // Predicated region
    $region2: #{tpu_custom_call.1} parent=1 // pred_check
      _
    $region3: #{tpu_custom_call.1} parent=1 // pred_check_branch
      %9 = sbr.rel (0) target = $region5
    $region4: #{tpu_custom_call.1} parent=1 // pred_region
      _
    $region5: #{tpu_custom_call.1} parent=1 // pred_fallthru
      _
    // Predicated region
    $region6: #{tpu_custom_call.1} parent=1 // pred_check
      _
    $region7: #{tpu_custom_call.1} parent=1 // pred_check_branch
      %11 = sbr.rel (0) target = $region9
    $region8: #{tpu_custom_call.1} parent=1 // pred_region
      _
    $region9: #{tpu_custom_call.1} parent=1 // pred_fallthru
      _
    %p12 = scmp.eq.s32.totalorder 0, 0
    // Predicated region
    $region10: #{tpu_custom_call.1} parent=1 // pred_check
      %p13 = pneg %p12
    $region11: #{tpu_custom_call.1} parent=1 // pred_check_branch
      %15 = sbr.rel (%p13) target = $region13
    $region12: #{tpu_custom_call.1} parent=1 // pred_region
      %16 = vst [vmem:[#allocation2] sm:$0xff] 0.0
      %17 = vst [vmem:[#allocation2 + $0x8] sm:$0xff] 0.0
      %18 = vst [vmem:[#allocation2 + $0x10] sm:$0xff] 0.0
      %19 = vst [vmem:[#allocation2 + $0x18] sm:$0xff] 0.0
      %20 = vst [vmem:[#allocation2 + $0x20] sm:$0xff] 0.0
      %21 = vst [vmem:[#allocation2 + $0x28] sm:$0xff] 0.0
    $region13: #{tpu_custom_call.1} parent=1 // pred_fallthru
      _
    %v22 = vld [vmem:[%s0] sm:$0xff]
    %v23 = vld [vmem:[%s0 + $0x8] sm:$0xff]
    %24 = vst [vmem:[#allocation2 + $0x20] sm:$0xff] %v22
    %25 = vst [vmem:[#allocation2 + $0x28] sm:$0xff] %v23
    %v26 = vld [vmem:[%s1] sm:$0xff]
    %v27 = vld [vmem:[%s1 + $0x8] sm:$0xff]
    %v28 = vld [vmem:[%s1 + $0x10] sm:$0xff]
    %v29 = vld [vmem:[%s1 + $0x18] sm:$0xff]
    %v30 = vld [vmem:[%s1 + $0x20] sm:$0xff]
    %v31 = vld [vmem:[%s1 + $0x28] sm:$0xff]
    %v32 = vld [vmem:[%s1 + $0x30] sm:$0xff]
    %v33 = vld [vmem:[%s1 + $0x38] sm:$0xff]
    %v34 = vld [vmem:[%s1 + $0x40] sm:$0xff]
    %v35 = vld [vmem:[%s1 + $0x48] sm:$0xff]
    %v36 = vld [vmem:[%s1 + $0x50] sm:$0xff]
    %v37 = vld [vmem:[%s1 + $0x58] sm:$0xff]
    %v38 = vld [vmem:[%s1 + $0x60] sm:$0xff]
    %v39 = vld [vmem:[%s1 + $0x68] sm:$0xff]
    %v40 = vld [vmem:[%s1 + $0x70] sm:$0xff]
    %v41 = vld [vmem:[%s1 + $0x78] sm:$0xff]
    %v42 = vld [vmem:[%s1 + $0x80] sm:$0xff]
    %v43 = vld [vmem:[%s1 + $0x88] sm:$0xff]
    %v44 = vld [vmem:[%s1 + $0x90] sm:$0xff]
    %v45 = vld [vmem:[%s1 + $0x98] sm:$0xff]
    %v46 = vld [vmem:[%s1 + $0xa0] sm:$0xff]
    %v47 = vld [vmem:[%s1 + $0xa8] sm:$0xff]
    %v48 = vld [vmem:[%s1 + $0xb0] sm:$0xff]
    %v49 = vld [vmem:[%s1 + $0xb8] sm:$0xff]
    %v50 = vld [vmem:[%s1 + $0xc0] sm:$0xff]
    %v51 = vld [vmem:[%s1 + $0xc8] sm:$0xff]
    %v52 = vld [vmem:[%s1 + $0xd0] sm:$0xff]
    %v53 = vld [vmem:[%s1 + $0xd8] sm:$0xff]
    %v54 = vld [vmem:[%s1 + $0xe0] sm:$0xff]
    %v55 = vld [vmem:[%s1 + $0xe8] sm:$0xff]
    %v56 = vld [vmem:[%s1 + $0xf0] sm:$0xff]
    %v57 = vld [vmem:[%s1 + $0xf8] sm:$0xff]
    %v58 = vld [vmem:[%s1 + $0x100] sm:$0xff]
    %v59 = vld [vmem:[%s1 + $0x108] sm:$0xff]
    %v60 = vld [vmem:[%s1 + $0x110] sm:$0xff]
    %v61 = vld [vmem:[%s1 + $0x118] sm:$0xff]
    %v62 = vld [vmem:[%s1 + $0x120] sm:$0xff]
    %v63 = vld [vmem:[%s1 + $0x128] sm:$0xff]
    %v64 = vld [vmem:[%s1 + $0x130] sm:$0xff]
    %v65 = vld [vmem:[%s1 + $0x138] sm:$0xff]
    %v66 = vld [vmem:[%s1 + $0x140] sm:$0xff]
    %v67 = vld [vmem:[%s1 + $0x148] sm:$0xff]
    %v68 = vld [vmem:[%s1 + $0x150] sm:$0xff]
    %v69 = vld [vmem:[%s1 + $0x158] sm:$0xff]
    %v70 = vld [vmem:[%s1 + $0x160] sm:$0xff]
    %v71 = vld [vmem:[%s1 + $0x168] sm:$0xff]
    %v72 = vld [vmem:[%s1 + $0x170] sm:$0xff]
    %v73 = vld [vmem:[%s1 + $0x178] sm:$0xff]
    %v74 = vld [vmem:[%s1 + $0x180] sm:$0xff]
    %v75 = vld [vmem:[%s1 + $0x188] sm:$0xff]
    %v76 = vld [vmem:[%s1 + $0x190] sm:$0xff]
    %v77 = vld [vmem:[%s1 + $0x198] sm:$0xff]
    %v78 = vld [vmem:[%s1 + $0x1a0] sm:$0xff]
    %v79 = vld [vmem:[%s1 + $0x1a8] sm:$0xff]
    %v80 = vld [vmem:[%s1 + $0x1b0] sm:$0xff]
    %v81 = vld [vmem:[%s1 + $0x1b8] sm:$0xff]
    %v82 = vld [vmem:[%s1 + $0x1c0] sm:$0xff]
    %v83 = vld [vmem:[%s1 + $0x1c8] sm:$0xff]
    %v84 = vld [vmem:[%s1 + $0x1d0] sm:$0xff]
    %v85 = vld [vmem:[%s1 + $0x1d8] sm:$0xff]
    %v86 = vld [vmem:[%s1 + $0x1e0] sm:$0xff]
    %v87 = vld [vmem:[%s1 + $0x1e8] sm:$0xff]
    %v88 = vld [vmem:[%s1 + $0x1f0] sm:$0xff]
    %v89 = vld [vmem:[%s1 + $0x1f8] sm:$0xff]
    %v90 = vld [vmem:[#allocation2] sm:$0xff]
    %v91 = vld [vmem:[#allocation2 + $0x8] sm:$0xff]
    %v92 = vld [vmem:[#allocation2 + $0x10] sm:$0xff]
    %v93 = vld [vmem:[#allocation2 + $0x18] sm:$0xff]
    %v94 = vld [vmem:[#allocation2 + $0x20] sm:$0xff]
    %v95 = vld [vmem:[#allocation2 + $0x28] sm:$0xff]
    %vm96 = vcmask 392192
    %v98 = vsel %vm96, %v26, 0
    %v101 = vsel %vm96, %v27, 0
    %v104 = vsel %vm96, %v28, 0
    %v107 = vsel %vm96, %v29, 0
    %v110 = vsel %vm96, %v30, 0
    %v113 = vsel %vm96, %v31, 0
    %v116 = vsel %vm96, %v32, 0
    %v119 = vsel %vm96, %v33, 0
    %v122 = vsel %vm96, %v34, 0
    %v125 = vsel %vm96, %v35, 0
    %v128 = vsel %vm96, %v36, 0
    %v131 = vsel %vm96, %v37, 0
    %v134 = vsel %vm96, %v38, 0
    %v137 = vsel %vm96, %v39, 0
    %v140 = vsel %vm96, %v40, 0
    %v143 = vsel %vm96, %v41, 0
    %v146 = vsel %vm96, %v42, 0
    %v149 = vsel %vm96, %v43, 0
    %v152 = vsel %vm96, %v44, 0
    %v155 = vsel %vm96, %v45, 0
    %v158 = vsel %vm96, %v46, 0
    %v161 = vsel %vm96, %v47, 0
    %v164 = vsel %vm96, %v48, 0
    %v167 = vsel %vm96, %v49, 0
    %v170 = vsel %vm96, %v50, 0
    %v173 = vsel %vm96, %v51, 0
    %v176 = vsel %vm96, %v52, 0
    %v179 = vsel %vm96, %v53, 0
    %v182 = vsel %vm96, %v54, 0
    %v185 = vsel %vm96, %v55, 0
    %v188 = vsel %vm96, %v56, 0
    %v191 = vsel %vm96, %v57, 0
    %v194 = vsel %vm96, %v58, 0
    %v197 = vsel %vm96, %v59, 0
    %v200 = vsel %vm96, %v60, 0
    %v203 = vsel %vm96, %v61, 0
    %v206 = vsel %vm96, %v62, 0
    %v209 = vsel %vm96, %v63, 0
    %v212 = vsel %vm96, %v64, 0
    %v215 = vsel %vm96, %v65, 0
    %v218 = vsel %vm96, %v66, 0
    %v221 = vsel %vm96, %v67, 0
    %v224 = vsel %vm96, %v68, 0
    %v227 = vsel %vm96, %v69, 0
    %v230 = vsel %vm96, %v70, 0
    %v233 = vsel %vm96, %v71, 0
    %v236 = vsel %vm96, %v72, 0
    %v239 = vsel %vm96, %v73, 0
    %v242 = vsel %vm96, %v74, 0
    %v245 = vsel %vm96, %v75, 0
    %v248 = vsel %vm96, %v76, 0
    %v251 = vsel %vm96, %v77, 0
    %v254 = vsel %vm96, %v78, 0
    %v257 = vsel %vm96, %v79, 0
    %v260 = vsel %vm96, %v80, 0
    %v263 = vsel %vm96, %v81, 0
    %v266 = vsel %vm96, %v82, 0
    %v269 = vsel %vm96, %v83, 0
    %v272 = vsel %vm96, %v84, 0
    %v275 = vsel %vm96, %v85, 0
    %v278 = vsel %vm96, %v86, 0
    %v281 = vsel %vm96, %v87, 0
    %v284 = vsel %vm96, %v88, 0
    %v287 = vsel %vm96, %v89, 0
    %289 = vmatpush.msra.mxu0 0.0
    %290 = vmatpush.msra.mxu0 0.0
    %291 = vmatpush.msra.mxu0 0.0
    %292 = vmatpush.msra.mxu0 0.0
    %293 = vmatpush.msra.mxu0 0.0
    %294 = vmatpush.msra.mxu0 0.0
    %295 = vmatpush.msra.mxu0 0.0
    %296 = vmatpush.msra.mxu0 0.0
    %297 = vmatpush.msra.mxu0 0.0
    %298 = vmatpush.msra.mxu0 0.0
    %299 = vmatpush.msra.mxu0 %v95
    %300 = vmatpush.msra.mxu0 %v94
    %301 = vmatpush.msra.mxu0 %v93
    %302 = vmatpush.msra.mxu0 %v92
    %303 = vmatpush.msra.mxu0 %v91
    %304 = vmatpush.msra.mxu0 %v90
    %305 = vmatmul.f32.gmra.mxu0 %v98
    %v306 = vpop.f32.mrf.mxu0
    %v307 = vadd.f32 0.0, %v306
    %308 = vmatmul.f32.gmra.mxu0 %v101
    %v309 = vpop.f32.mrf.mxu0
    %v310 = vadd.f32 0.0, %v309
    %311 = vmatmul.f32.gmra.mxu0 %v104
    %v312 = vpop.f32.mrf.mxu0
    %v313 = vadd.f32 0.0, %v312
    %314 = vmatmul.f32.gmra.mxu0 %v107
    %v315 = vpop.f32.mrf.mxu0
    %v316 = vadd.f32 0.0, %v315
    %317 = vmatmul.f32.gmra.mxu0 %v110
    %v318 = vpop.f32.mrf.mxu0
    %v319 = vadd.f32 0.0, %v318
    %320 = vmatmul.f32.gmra.mxu0 %v113
    %v321 = vpop.f32.mrf.mxu0
    %v322 = vadd.f32 0.0, %v321
    %323 = vmatmul.f32.gmra.mxu0 %v116
    %v324 = vpop.f32.mrf.mxu0
    %v325 = vadd.f32 0.0, %v324
    %326 = vmatmul.f32.gmra.mxu0 %v119
    %v327 = vpop.f32.mrf.mxu0
    %v328 = vadd.f32 0.0, %v327
    %329 = vmatmul.f32.gmra.mxu0 %v122
    %v330 = vpop.f32.mrf.mxu0
    %v331 = vadd.f32 0.0, %v330
    %332 = vmatmul.f32.gmra.mxu0 %v125
    %v333 = vpop.f32.mrf.mxu0
    %v334 = vadd.f32 0.0, %v333
    %335 = vmatmul.f32.gmra.mxu0 %v128
    %v336 = vpop.f32.mrf.mxu0
    %v337 = vadd.f32 0.0, %v336
    %338 = vmatmul.f32.gmra.mxu0 %v131
    %v339 = vpop.f32.mrf.mxu0
    %v340 = vadd.f32 0.0, %v339
    %341 = vmatmul.f32.gmra.mxu0 %v134
    %v342 = vpop.f32.mrf.mxu0
    %v343 = vadd.f32 0.0, %v342
    %344 = vmatmul.f32.gmra.mxu0 %v137
    %v345 = vpop.f32.mrf.mxu0
    %v346 = vadd.f32 0.0, %v345
    %347 = vmatmul.f32.gmra.mxu0 %v140
    %v348 = vpop.f32.mrf.mxu0
    %v349 = vadd.f32 0.0, %v348
    %350 = vmatmul.f32.gmra.mxu0 %v143
    %v351 = vpop.f32.mrf.mxu0
    %v352 = vadd.f32 0.0, %v351
    %353 = vmatmul.f32.gmra.mxu0 %v146
    %v354 = vpop.f32.mrf.mxu0
    %v355 = vadd.f32 0.0, %v354
    %356 = vmatmul.f32.gmra.mxu0 %v149
    %v357 = vpop.f32.mrf.mxu0
    %v358 = vadd.f32 0.0, %v357
    %359 = vmatmul.f32.gmra.mxu0 %v152
    %v360 = vpop.f32.mrf.mxu0
    %v361 = vadd.f32 0.0, %v360
    %362 = vmatmul.f32.gmra.mxu0 %v155
    %v363 = vpop.f32.mrf.mxu0
    %v364 = vadd.f32 0.0, %v363
    %365 = vmatmul.f32.gmra.mxu0 %v158
    %v366 = vpop.f32.mrf.mxu0
    %v367 = vadd.f32 0.0, %v366
    %368 = vmatmul.f32.gmra.mxu0 %v161
    %v369 = vpop.f32.mrf.mxu0
    %v370 = vadd.f32 0.0, %v369
    %371 = vmatmul.f32.gmra.mxu0 %v164
    %v372 = vpop.f32.mrf.mxu0
    %v373 = vadd.f32 0.0, %v372
    %374 = vmatmul.f32.gmra.mxu0 %v167
    %v375 = vpop.f32.mrf.mxu0
    %v376 = vadd.f32 0.0, %v375
    %377 = vmatmul.f32.gmra.mxu0 %v170
    %v378 = vpop.f32.mrf.mxu0
    %v379 = vadd.f32 0.0, %v378
    %380 = vmatmul.f32.gmra.mxu0 %v173
    %v381 = vpop.f32.mrf.mxu0
    %v382 = vadd.f32 0.0, %v381
    %383 = vmatmul.f32.gmra.mxu0 %v176
    %v384 = vpop.f32.mrf.mxu0
    %v385 = vadd.f32 0.0, %v384
    %386 = vmatmul.f32.gmra.mxu0 %v179
    %v387 = vpop.f32.mrf.mxu0
    %v388 = vadd.f32 0.0, %v387
    %389 = vmatmul.f32.gmra.mxu0 %v182
    %v390 = vpop.f32.mrf.mxu0
    %v391 = vadd.f32 0.0, %v390
    %392 = vmatmul.f32.gmra.mxu0 %v185
    %v393 = vpop.f32.mrf.mxu0
    %v394 = vadd.f32 0.0, %v393
    %395 = vmatmul.f32.gmra.mxu0 %v188
    %v396 = vpop.f32.mrf.mxu0
    %v397 = vadd.f32 0.0, %v396
    %398 = vmatmul.f32.gmra.mxu0 %v191
    %v399 = vpop.f32.mrf.mxu0
    %v400 = vadd.f32 0.0, %v399
    %401 = vmatmul.f32.gmra.mxu0 %v194
    %v402 = vpop.f32.mrf.mxu0
    %v403 = vadd.f32 0.0, %v402
    %404 = vmatmul.f32.gmra.mxu0 %v197
    %v405 = vpop.f32.mrf.mxu0
    %v406 = vadd.f32 0.0, %v405
    %407 = vmatmul.f32.gmra.mxu0 %v200
    %v408 = vpop.f32.mrf.mxu0
    %v409 = vadd.f32 0.0, %v408
    %410 = vmatmul.f32.gmra.mxu0 %v203
    %v411 = vpop.f32.mrf.mxu0
    %v412 = vadd.f32 0.0, %v411
    %413 = vmatmul.f32.gmra.mxu0 %v206
    %v414 = vpop.f32.mrf.mxu0
    %v415 = vadd.f32 0.0, %v414
    %416 = vmatmul.f32.gmra.mxu0 %v209
    %v417 = vpop.f32.mrf.mxu0
    %v418 = vadd.f32 0.0, %v417
    %419 = vmatmul.f32.gmra.mxu0 %v212
    %v420 = vpop.f32.mrf.mxu0
    %v421 = vadd.f32 0.0, %v420
    %422 = vmatmul.f32.gmra.mxu0 %v215
    %v423 = vpop.f32.mrf.mxu0
    %v424 = vadd.f32 0.0, %v423
    %425 = vmatmul.f32.gmra.mxu0 %v218
    %v426 = vpop.f32.mrf.mxu0
    %v427 = vadd.f32 0.0, %v426
    %428 = vmatmul.f32.gmra.mxu0 %v221
    %v429 = vpop.f32.mrf.mxu0
    %v430 = vadd.f32 0.0, %v429
    %431 = vmatmul.f32.gmra.mxu0 %v224
    %v432 = vpop.f32.mrf.mxu0
    %v433 = vadd.f32 0.0, %v432
    %434 = vmatmul.f32.gmra.mxu0 %v227
    %v435 = vpop.f32.mrf.mxu0
    %v436 = vadd.f32 0.0, %v435
    %437 = vmatmul.f32.gmra.mxu0 %v230
    %v438 = vpop.f32.mrf.mxu0
    %v439 = vadd.f32 0.0, %v438
    %440 = vmatmul.f32.gmra.mxu0 %v233
    %v441 = vpop.f32.mrf.mxu0
    %v442 = vadd.f32 0.0, %v441
    %443 = vmatmul.f32.gmra.mxu0 %v236
    %v444 = vpop.f32.mrf.mxu0
    %v445 = vadd.f32 0.0, %v444
    %446 = vmatmul.f32.gmra.mxu0 %v239
    %v447 = vpop.f32.mrf.mxu0
    %v448 = vadd.f32 0.0, %v447
    %449 = vmatmul.f32.gmra.mxu0 %v242
    %v450 = vpop.f32.mrf.mxu0
    %v451 = vadd.f32 0.0, %v450
    %452 = vmatmul.f32.gmra.mxu0 %v245
    %v453 = vpop.f32.mrf.mxu0
    %v454 = vadd.f32 0.0, %v453
    %455 = vmatmul.f32.gmra.mxu0 %v248
    %v456 = vpop.f32.mrf.mxu0
    %v457 = vadd.f32 0.0, %v456
    %458 = vmatmul.f32.gmra.mxu0 %v251
    %v459 = vpop.f32.mrf.mxu0
    %v460 = vadd.f32 0.0, %v459
    %461 = vmatmul.f32.gmra.mxu0 %v254
    %v462 = vpop.f32.mrf.mxu0
    %v463 = vadd.f32 0.0, %v462
    %464 = vmatmul.f32.gmra.mxu0 %v257
    %v465 = vpop.f32.mrf.mxu0
    %v466 = vadd.f32 0.0, %v465
    %467 = vmatmul.f32.gmra.mxu0 %v260
    %v468 = vpop.f32.mrf.mxu0
    %v469 = vadd.f32 0.0, %v468
    %470 = vmatmul.f32.gmra.mxu0 %v263
    %v471 = vpop.f32.mrf.mxu0
    %v472 = vadd.f32 0.0, %v471
    %473 = vmatmul.f32.gmra.mxu0 %v266
    %v474 = vpop.f32.mrf.mxu0
    %v475 = vadd.f32 0.0, %v474
    %476 = vmatmul.f32.gmra.mxu0 %v269
    %v477 = vpop.f32.mrf.mxu0
    %v478 = vadd.f32 0.0, %v477
    %479 = vmatmul.f32.gmra.mxu0 %v272
    %v480 = vpop.f32.mrf.mxu0
    %v481 = vadd.f32 0.0, %v480
    %482 = vmatmul.f32.gmra.mxu0 %v275
    %v483 = vpop.f32.mrf.mxu0
    %v484 = vadd.f32 0.0, %v483
    %485 = vmatmul.f32.gmra.mxu0 %v278
    %v486 = vpop.f32.mrf.mxu0
    %v487 = vadd.f32 0.0, %v486
    %488 = vmatmul.f32.gmra.mxu0 %v281
    %v489 = vpop.f32.mrf.mxu0
    %v490 = vadd.f32 0.0, %v489
    %491 = vmatmul.f32.gmra.mxu0 %v284
    %v492 = vpop.f32.mrf.mxu0
    %v493 = vadd.f32 0.0, %v492
    %494 = vmatmul.f32.gmra.mxu0 %v287
    %v495 = vpop.f32.mrf.mxu0
    %v496 = vadd.f32 0.0, %v495
    %497 = vdwg.mxu0
    %498 = vst [vmem:[#allocation3] sm:$0xff] %v307
    %499 = vst [vmem:[#allocation3 + $0x8] sm:$0xff] %v310
    %500 = vst [vmem:[#allocation3 + $0x10] sm:$0xff] %v313
    %501 = vst [vmem:[#allocation3 + $0x18] sm:$0xff] %v316
    %502 = vst [vmem:[#allocation3 + $0x20] sm:$0xff] %v319
    %503 = vst [vmem:[#allocation3 + $0x28] sm:$0xff] %v322
    %504 = vst [vmem:[#allocation3 + $0x30] sm:$0xff] %v325
    %505 = vst [vmem:[#allocation3 + $0x38] sm:$0xff] %v328
    %506 = vst [vmem:[#allocation3 + $0x40] sm:$0xff] %v331
    %507 = vst [vmem:[#allocation3 + $0x48] sm:$0xff] %v334
    %508 = vst [vmem:[#allocation3 + $0x50] sm:$0xff] %v337
    %509 = vst [vmem:[#allocation3 + $0x58] sm:$0xff] %v340
    %510 = vst [vmem:[#allocation3 + $0x60] sm:$0xff] %v343
    %511 = vst [vmem:[#allocation3 + $0x68] sm:$0xff] %v346
    %512 = vst [vmem:[#allocation3 + $0x70] sm:$0xff] %v349
    %513 = vst [vmem:[#allocation3 + $0x78] sm:$0xff] %v352
    %514 = vst [vmem:[#allocation3 + $0x80] sm:$0xff] %v355
    %515 = vst [vmem:[#allocation3 + $0x88] sm:$0xff] %v358
    %516 = vst [vmem:[#allocation3 + $0x90] sm:$0xff] %v361
    %517 = vst [vmem:[#allocation3 + $0x98] sm:$0xff] %v364
    %518 = vst [vmem:[#allocation3 + $0xa0] sm:$0xff] %v367
    %519 = vst [vmem:[#allocation3 + $0xa8] sm:$0xff] %v370
    %520 = vst [vmem:[#allocation3 + $0xb0] sm:$0xff] %v373
    %521 = vst [vmem:[#allocation3 + $0xb8] sm:$0xff] %v376
    %522 = vst [vmem:[#allocation3 + $0xc0] sm:$0xff] %v379
    %523 = vst [vmem:[#allocation3 + $0xc8] sm:$0xff] %v382
    %524 = vst [vmem:[#allocation3 + $0xd0] sm:$0xff] %v385
    %525 = vst [vmem:[#allocation3 + $0xd8] sm:$0xff] %v388
    %526 = vst [vmem:[#allocation3 + $0xe0] sm:$0xff] %v391
    %527 = vst [vmem:[#allocation3 + $0xe8] sm:$0xff] %v394
    %528 = vst [vmem:[#allocation3 + $0xf0] sm:$0xff] %v397
    %529 = vst [vmem:[#allocation3 + $0xf8] sm:$0xff] %v400
    %530 = vst [vmem:[#allocation3 + $0x100] sm:$0xff] %v403
    %531 = vst [vmem:[#allocation3 + $0x108] sm:$0xff] %v406
    %532 = vst [vmem:[#allocation3 + $0x110] sm:$0xff] %v409
    %533 = vst [vmem:[#allocation3 + $0x118] sm:$0xff] %v412
    %534 = vst [vmem:[#allocation3 + $0x120] sm:$0xff] %v415
    %535 = vst [vmem:[#allocation3 + $0x128] sm:$0xff] %v418
    %536 = vst [vmem:[#allocation3 + $0x130] sm:$0xff] %v421
    %537 = vst [vmem:[#allocation3 + $0x138] sm:$0xff] %v424
    %538 = vst [vmem:[#allocation3 + $0x140] sm:$0xff] %v427
    %539 = vst [vmem:[#allocation3 + $0x148] sm:$0xff] %v430
    %540 = vst [vmem:[#allocation3 + $0x150] sm:$0xff] %v433
    %541 = vst [vmem:[#allocation3 + $0x158] sm:$0xff] %v436
    %542 = vst [vmem:[#allocation3 + $0x160] sm:$0xff] %v439
    %543 = vst [vmem:[#allocation3 + $0x168] sm:$0xff] %v442
    %544 = vst [vmem:[#allocation3 + $0x170] sm:$0xff] %v445
    %545 = vst [vmem:[#allocation3 + $0x178] sm:$0xff] %v448
    %546 = vst [vmem:[#allocation3 + $0x180] sm:$0xff] %v451
    %547 = vst [vmem:[#allocation3 + $0x188] sm:$0xff] %v454
    %548 = vst [vmem:[#allocation3 + $0x190] sm:$0xff] %v457
    %549 = vst [vmem:[#allocation3 + $0x198] sm:$0xff] %v460
    %550 = vst [vmem:[#allocation3 + $0x1a0] sm:$0xff] %v463
    %551 = vst [vmem:[#allocation3 + $0x1a8] sm:$0xff] %v466
    %552 = vst [vmem:[#allocation3 + $0x1b0] sm:$0xff] %v469
    %553 = vst [vmem:[#allocation3 + $0x1b8] sm:$0xff] %v472
    %554 = vst [vmem:[#allocation3 + $0x1c0] sm:$0xff] %v475
    %555 = vst [vmem:[#allocation3 + $0x1c8] sm:$0xff] %v478
    %556 = vst [vmem:[#allocation3 + $0x1d0] sm:$0xff] %v481
    %557 = vst [vmem:[#allocation3 + $0x1d8] sm:$0xff] %v484
    %558 = vst [vmem:[#allocation3 + $0x1e0] sm:$0xff] %v487
    %559 = vst [vmem:[#allocation3 + $0x1e8] sm:$0xff] %v490
    %560 = vst [vmem:[#allocation3 + $0x1f0] sm:$0xff] %v493
    %561 = vst [vmem:[#allocation3 + $0x1f8] sm:$0xff] %v496
    %v562 = vld [vmem:[#allocation3 + $0x1e0] sm:$0xff]
    %v563 = vld [vmem:[#allocation3 + $0x1e8] sm:$0xff]
    %v564 = vld [vmem:[#allocation3 + $0x1f0] sm:$0xff]
    %v565 = vld [vmem:[#allocation3 + $0x1f8] sm:$0xff]
    %566 = vst [vmem:[#allocation2] sm:$0xff] %v562
    %567 = vst [vmem:[#allocation2 + $0x8] sm:$0xff] %v563
    %568 = vst [vmem:[#allocation2 + $0x10] sm:$0xff] %v564
    %569 = vst [vmem:[#allocation2 + $0x18] sm:$0xff] %v565
    // Predicated region
    $region14: #{tpu_custom_call.1} parent=1 // pred_check
      _
    $region15: #{tpu_custom_call.1} parent=1 // pred_check_branch
      %571 = sbr.rel (0) target = $region17
    $region16: #{tpu_custom_call.1} parent=1 // pred_region
      %573 = vsyncadd [#allocation4], 0
      %s574 = sshll.u32 [#allocation3], 4
      %s575 = int_to_ptr.vmem [resolvable:$true] %s574
      %s576 = sshll.u32 %s2, 4
      %s577 = int_to_ptr.hbm [resolvable:$true] %s576
      %582 = dma.vmem_to_hbm [thread:$0]  %s575, 8192, %s577, [#allocation4], 128, 128, 8
    $region17: #{tpu_custom_call.1} parent=1 // pred_fallthru
      _
    // Predicated region
    $region18: #{tpu_custom_call.1} parent=1 // pred_check
      _
    $region19: #{tpu_custom_call.1} parent=1 // pred_check_branch
      %584 = sbr.rel (0) target = $region21
    $region20: #{tpu_custom_call.1} parent=1 // pred_region
      %586 = dma.done [#allocation4], 8192
    $region21: #{tpu_custom_call.1} parent=1 // pred_fallthru
      _
    %587 = vsyncpa [#allocation4], 1

</llo_original>
